<compile_context>
chip_gen: v5e
topology: v5e:2x2
jax: 0.10.0
libtpu: 0.0.40
codegen_flags: <defaults>
</compile_context>

<pallas_src>
from functools import partial

import jax
import jax.numpy as jnp
from jax.experimental import pallas as pl
from jax.experimental.pallas import tpu as pltpu


def _round_up(x, m):
    return ((x + m - 1) // m) * m


# ---------------------------------------------------------------------------
# Kernel 1: symmetric contrastive (CLIP) loss, one text/deg slot per grid step
# ---------------------------------------------------------------------------
_CONTRACT_D = (((1,), (1,)), ((), ()))   # contract dim 1 (D) of both operands


def _clip_pair_loss_kernel(scale_ref, img_ref, txt_ref, out_ref):
    scale = scale_ref[0]
    img = img_ref[...]      # [B, D], native dtype straight into the MXU
    txt = txt_ref[0]        # [B, D]

    # logits_per_image = scale * img @ txt.T  (transpose-free)
    logits_i = scale * jax.lax.dot_general(
        img, txt, _CONTRACT_D, preferred_element_type=jnp.float32)    # [B, B]
    # logits_per_text = scale * txt @ img.T  -- second MXU matmul so both softmax
    # reductions are lane-major (axis=-1) instead of sublane/XLU reductions.
    logits_t = scale * jax.lax.dot_general(
        txt, img, _CONTRACT_D, preferred_element_type=jnp.float32)    # [B, B]

    b = logits_i.shape[0]
    row_ids = jax.lax.broadcasted_iota(jnp.int32, (b, b), 0)
    col_ids = jax.lax.broadcasted_iota(jnp.int32, (b, b), 1)
    # diagonal is shared by both directions -> compute once
    diag_sum = jnp.sum(jnp.where(row_ids == col_ids, logits_i, 0.0))

    m_i = jnp.max(logits_i, axis=1, keepdims=True)
    lse_i = m_i + jnp.log(jnp.sum(jnp.exp(logits_i - m_i), axis=1, keepdims=True))
    m_t = jnp.max(logits_t, axis=1, keepdims=True)
    lse_t = m_t + jnp.log(jnp.sum(jnp.exp(logits_t - m_t), axis=1, keepdims=True))

    # 0.5 * (CE(logits_i, arange) + CE(logits_t, arange))
    loss = (jnp.sum(lse_i) + jnp.sum(lse_t) - 2.0 * diag_sum) / (2.0 * b)

    # lane-dense (128-wide) per-slot output row
    out_ref[...] = loss * jnp.ones(out_ref.shape, jnp.float32)


def clip_contrastive_loss(image_features, text_stack, logit_scale):
    """text_stack: [N, B, D]; returns mean over N of symmetric per-slot CLIP losses."""
    n, b, d = text_stack.shape
    scale = jnp.asarray(logit_scale, jnp.float32).reshape(1)
    out = pl.pallas_call(
        _clip_pair_loss_kernel,
        out_shape=jax.ShapeDtypeStruct((n, 1, 128), jnp.float32),
        grid_spec=pltpu.PrefetchScalarGridSpec(
            num_scalar_prefetch=0,
            grid=(n,),
            in_specs=[
                pl.BlockSpec(memory_space=pltpu.MemorySpace.SMEM),   # logit_scale
                pl.BlockSpec((b, d), lambda s: (0, 0)),              # image_features (resident)
                pl.BlockSpec((1, b, d), lambda s: (s, 0, 0)),        # one text/deg slot
            ],
            out_specs=pl.BlockSpec((1, 1, 128), lambda s: (s, 0, 0)),  # per-slot loss row
        ),
        compiler_params=pltpu.CompilerParams(dimension_semantics=("parallel",)),
    )(scale, image_features, text_stack)
    return jnp.sum(out[:, 0, 0]) / n


# ---------------------------------------------------------------------------
# Kernel 2: caption cross-entropy with ignore_index (row-tiled, partial sums)
# ---------------------------------------------------------------------------
def _caption_ce_kernel(labels_ref, logits_ref, out_ref, *, pad_id):
    logits = logits_ref[...].astype(jnp.float32)     # [TN, V]
    tn, v = logits.shape
    lbl = labels_ref[...]                            # [TN, 1] int32

    vocab_ids = jax.lax.broadcasted_iota(jnp.int32, (tn, v), 1)
    picked = jnp.sum(jnp.where(vocab_ids == lbl, logits, 0.0),
                     axis=1, keepdims=True)                          # [TN, 1]

    row_max = jnp.max(logits, axis=1, keepdims=True)
    lse = row_max + jnp.log(jnp.sum(jnp.exp(logits - row_max), axis=1, keepdims=True))

    valid = (lbl != pad_id).astype(jnp.float32)                      # [TN, 1]
    loss_sum = jnp.sum(valid * (lse - picked))
    count = jnp.sum(valid)

    # per-tile partials in a lane-dense row: lane 0 = loss sum, lane 1 = token count
    lane = jax.lax.broadcasted_iota(jnp.int32, out_ref.shape, 2)
    out_ref[...] = jnp.where(lane == 0, loss_sum,
                             jnp.where(lane == 1, count, 0.0))


def caption_cross_entropy(logits, labels, pad_id):
    """logits: [B, T, V] (== torch logits before .permute(0,2,1)); labels: [B, T]."""
    b, t, v = logits.shape
    n = b * t
    logits2 = logits.reshape(n, v)                      # keep native dtype
    labels2 = labels.reshape(n, 1).astype(jnp.int32)

    # Pick a row tile that keeps ~2x(tile_n x V) logits buffers well inside the
    # scoped VMEM limit on every generation (v7x has only 64 MiB physical).
    bytes_per_row = v * jnp.dtype(logits.dtype).itemsize
    max_rows = max(8, (int((16 * 1024 * 1024) // max(bytes_per_row, 1)) // 8) * 8)
    tile_n = min(512, max_rows, _round_up(n, 8))
    n_pad = _round_up(n, tile_n)
    if n_pad != n:
        logits2 = jnp.pad(logits2, ((0, n_pad - n), (0, 0)))
        labels2 = jnp.pad(labels2, ((0, n_pad - n), (0, 0)), constant_values=pad_id)
    num_tiles = n_pad // tile_n

    out = pl.pallas_call(
        partial(_caption_ce_kernel, pad_id=pad_id),
        out_shape=jax.ShapeDtypeStruct((num_tiles, 1, 128), jnp.float32),
        grid_spec=pltpu.PrefetchScalarGridSpec(
            num_scalar_prefetch=0,
            grid=(num_tiles,),
            in_specs=[
                pl.BlockSpec((tile_n, 1), lambda i: (i, 0)),
                pl.BlockSpec((tile_n, v), lambda i: (i, 0)),
            ],
            out_specs=pl.BlockSpec((1, 1, 128), lambda i: (i, 0, 0)),
        ),
        compiler_params=pltpu.CompilerParams(
            dimension_semantics=("parallel",),
            vmem_limit_bytes=48 * 1024 * 1024,
        ),
    )(labels2, logits2)

    loss_sum = jnp.sum(out[:, 0, 0])
    count = jnp.sum(out[:, 0, 1])
    return loss_sum / jnp.maximum(count, 1.0)


# ---------------------------------------------------------------------------
# CoCaLoss wrapper (world_size == 1, de_region is None)
# ---------------------------------------------------------------------------
class CoCaLossPallas:
    def __init__(self, caption_loss_weight, clip_loss_weight, pad_id=0):
        self.caption_loss_weight = float(caption_loss_weight)
        self.clip_loss_weight = float(clip_loss_weight)
        self.pad_id = int(pad_id)

    def __call__(self, image_features, text_features, logits, labels, logit_scale,
                 deg_img=None):
        clip_loss = jnp.float32(0.0)
        if self.clip_loss_weight:
            slots = jnp.transpose(text_features, (1, 0, 2))          # [N_txt, B, D]
            if deg_img is not None:
                deg_slots = jnp.transpose(deg_img, (1, 0, 2))        # [N_deg, B, D]
                slots = jnp.concatenate([slots, deg_slots], axis=0)
            clip_loss = self.clip_loss_weight * clip_contrastive_loss(
                image_features, slots, logit_scale)
        caption_loss = caption_cross_entropy(logits, labels, self.pad_id)
        caption_loss = caption_loss * self.caption_loss_weight
        return clip_loss, caption_loss


# ---------------------------------------------------------------------------
# Pure-JAX references (for correctness check only)
# ---------------------------------------------------------------------------
def _ref_pair_loss(img, txt, scale):
    logits = scale * img @ txt.T
    b = img.shape[0]
    idx = jnp.arange(b)
    li = -jax.nn.log_softmax(logits, axis=-1)[idx, idx].mean()
    lt = -jax.nn.log_softmax(logits.T, axis=-1)[idx, idx].mean()
    return 0.5 * (li + lt)


def _ref_clip_loss(img, slots, scale):
    losses = [_ref_pair_loss(img, slots[i], scale) for i in range(slots.shape[0])]
    return sum(losses) / slots.shape[0]


def _ref_caption_ce(logits, labels, pad_id):
    logits = logits.astype(jnp.float32)
    lse = jax.scipy.special.logsumexp(logits, axis=-1)
    picked = jnp.take_along_axis(logits, labels[..., None], axis=-1)[..., 0]
    valid = (labels != pad_id)
    return jnp.sum(jnp.where(valid, lse - picked, 0.0)) / jnp.sum(valid)


if __name__ == "__main__":
    key = jax.random.PRNGKey(0)
    k1, k2, k3, k4, k5 = jax.random.split(key, 5)

    B, D = 4, 32          # batch, embed dim
    N_TXT, N_DEG = 2, 3   # text / degradation slots
    T, V = 8, 128         # caption seq len, vocab size
    PAD_ID = 0

    image_features = jax.random.normal(k1, (B, D), jnp.float32)
    text_features = jax.random.normal(k2, (B, N_TXT, D), jnp.float32)
    deg_img = jax.random.normal(k3, (B, N_DEG, D), jnp.float32)
    # L2-normalize like CLIP encoders do
    image_features = image_features / jnp.linalg.norm(image_features, axis=-1, keepdims=True)
    text_features = text_features / jnp.linalg.norm(text_features, axis=-1, keepdims=True)
    deg_img = deg_img / jnp.linalg.norm(deg_img, axis=-1, keepdims=True)

    cap_logits = jax.random.normal(k4, (B, T, V), jnp.float32)
    cap_labels = jax.random.randint(k5, (B, T), 0, V, jnp.int32)
    # force some pad tokens to exercise ignore_index
    cap_labels = cap_labels.at[:, -2:].set(PAD_ID)

    logit_scale = jnp.float32(jnp.exp(2.0))

    loss_mod = CoCaLossPallas(caption_loss_weight=2.0, clip_loss_weight=1.0, pad_id=PAD_ID)
    clip_loss, caption_loss = loss_mod(image_features, text_features, cap_logits,
                                       cap_labels, logit_scale, deg_img=deg_img)
    clip_loss = jax.block_until_ready(clip_loss)
    caption_loss = jax.block_until_ready(caption_loss)

    # reference check
    slots = jnp.concatenate([jnp.transpose(text_features, (1, 0, 2)),
                             jnp.transpose(deg_img, (1, 0, 2))], axis=0)
    ref_clip = 1.0 * _ref_clip_loss(image_features, slots, logit_scale)
    ref_cap = 2.0 * _ref_caption_ce(cap_logits, cap_labels, PAD_ID)

    assert jnp.allclose(clip_loss, ref_clip, rtol=1e-4, atol=1e-4), (clip_loss, ref_clip)
    assert jnp.allclose(caption_loss, ref_cap, rtol=1e-4, atol=1e-4), (caption_loss, ref_cap)

    print("KERNEL_OK")
</pallas_src>

<mosaic_0001>
module attributes {stable_mosaic.version = 11 : i64} {
  func.func @_clip_pair_loss_kernel(%arg0: i32, %arg1: memref<1xf32, #tpu.memory_space<smem>>, %arg2: memref<4x32xf32, #tpu.memory_space<vmem>>, %arg3: memref<1x4x32xf32, #tpu.memory_space<vmem>>, %arg4: memref<1x1x128xf32, #tpu.memory_space<vmem>>) attributes {dimension_semantics = [#tpu.dimension_semantics<parallel>], iteration_bounds = array<i64: 5>, scalar_prefetch = 0 : i64, scratch_operands = 0 : i64, tpu.core_type = #tpu.core_type<tc>, window_params = [{transform_indices = @transform_0, window_bounds = array<i64: 1>}, {pipeline_mode = #tpu.pipeline_mode<synchronous>, transform_indices = @transform_1, window_bounds = array<i64: 4, 32>}, {transform_indices = @transform_2, window_bounds = array<i64: 1, 4, 32>}, {transform_indices = @transform_3, window_bounds = array<i64: 1, 1, 128>}]} {
    %c0 = arith.constant 0 : index
    %0 = memref.load %arg1[%c0] : memref<1xf32, #tpu.memory_space<smem>>
    %c0_0 = arith.constant 0 : index
    %c0_1 = arith.constant 0 : index
    %1 = vector.load %arg2[%c0_0, %c0_1] : memref<4x32xf32, #tpu.memory_space<vmem>>, vector<4x32xf32>
    %c0_2 = arith.constant 0 : index
    %c0_3 = arith.constant 0 : index
    %c0_4 = arith.constant 0 : index
    %2 = vector.load %arg3[%c0_2, %c0_3, %c0_4] : memref<1x4x32xf32, #tpu.memory_space<vmem>>, vector<1x4x32xf32>
    %3 = vector.shape_cast %2 : vector<1x4x32xf32> to vector<4x32xf32>
    %cst = arith.constant dense<0.000000e+00> : vector<4x4xf32>
    %4 = tpu.matmul %1, %3, %cst {dimension_numbers = #tpu.dot_dimension_numbers<[1], [1], [0], [0], [0, 0, 1, 0], [], []>} : vector<4x32xf32>, vector<4x32xf32>, vector<4x4xf32> -> vector<4x4xf32>
    %5 = vector.broadcast %0 : f32 to vector<4x4xf32>
    %6 = arith.mulf %5, %4 : vector<4x4xf32>
    %cst_5 = arith.constant dense<0.000000e+00> : vector<4x4xf32>
    %7 = tpu.matmul %3, %1, %cst_5 {dimension_numbers = #tpu.dot_dimension_numbers<[1], [1], [0], [0], [0, 0, 1, 0], [], []>} : vector<4x32xf32>, vector<4x32xf32>, vector<4x4xf32> -> vector<4x4xf32>
    %8 = vector.broadcast %0 : f32 to vector<4x4xf32>
    %9 = arith.mulf %8, %7 : vector<4x4xf32>
    %10 = tpu.iota {dimensions = array<i32: 0>} : vector<4x4xi32>
    %11 = tpu.iota {dimensions = array<i32: 1>} : vector<4x4xi32>
    %12 = arith.cmpi eq, %10, %11 : vector<4x4xi32>
    %cst_6 = arith.constant 0.000000e+00 : f32
    %13 = vector.broadcast %cst_6 : f32 to vector<4x4xf32>
    %14 = arith.select %12, %6, %13 : vector<4x4xi1>, vector<4x4xf32>
    %15 = vector.shape_cast %14 : vector<4x4xf32> to vector<1x4x4xf32>
    %cst_7 = arith.constant dense<0.000000e+00> : vector<1xf32>
    %16 = vector.multi_reduction <add>, %15, %cst_7 [1, 2] : vector<1x4x4xf32> to vector<1xf32>
    %17 = vector.shape_cast %16 : vector<1xf32> to vector<1x1x1xf32>
    %18 = vector.extract %17[0, 0, 0] : f32 from vector<1x1x1xf32>
    %cst_8 = arith.constant dense<0xFF800000> : vector<4xf32>
    %19 = vector.multi_reduction <maximumf>, %6, %cst_8 [1] : vector<4x4xf32> to vector<4xf32>
    %20 = vector.shape_cast %19 : vector<4xf32> to vector<4x1xf32>
    %21 = vector.broadcast %20 : vector<4x1xf32> to vector<4x4xf32>
    %22 = arith.subf %6, %21 : vector<4x4xf32>
    %23 = math.exp %22 : vector<4x4xf32>
    %cst_9 = arith.constant dense<0.000000e+00> : vector<4xf32>
    %24 = vector.multi_reduction <add>, %23, %cst_9 [1] : vector<4x4xf32> to vector<4xf32>
    %25 = vector.shape_cast %24 : vector<4xf32> to vector<4x1xf32>
    %26 = math.log %25 : vector<4x1xf32>
    %27 = arith.addf %20, %26 : vector<4x1xf32>
    %cst_10 = arith.constant dense<0xFF800000> : vector<4xf32>
    %28 = vector.multi_reduction <maximumf>, %9, %cst_10 [1] : vector<4x4xf32> to vector<4xf32>
    %29 = vector.shape_cast %28 : vector<4xf32> to vector<4x1xf32>
    %30 = vector.broadcast %29 : vector<4x1xf32> to vector<4x4xf32>
    %31 = arith.subf %9, %30 : vector<4x4xf32>
    %32 = math.exp %31 : vector<4x4xf32>
    %cst_11 = arith.constant dense<0.000000e+00> : vector<4xf32>
    %33 = vector.multi_reduction <add>, %32, %cst_11 [1] : vector<4x4xf32> to vector<4xf32>
    %34 = vector.shape_cast %33 : vector<4xf32> to vector<4x1xf32>
    %35 = math.log %34 : vector<4x1xf32>
    %36 = arith.addf %29, %35 : vector<4x1xf32>
    %37 = vector.shape_cast %27 : vector<4x1xf32> to vector<1x4x1xf32>
    %cst_12 = arith.constant dense<0.000000e+00> : vector<1xf32>
    %38 = vector.multi_reduction <add>, %37, %cst_12 [1, 2] : vector<1x4x1xf32> to vector<1xf32>
    %39 = vector.shape_cast %38 : vector<1xf32> to vector<1x1x1xf32>
    %40 = vector.extract %39[0, 0, 0] : f32 from vector<1x1x1xf32>
    %41 = vector.shape_cast %36 : vector<4x1xf32> to vector<1x4x1xf32>
    %cst_13 = arith.constant dense<0.000000e+00> : vector<1xf32>
    %42 = vector.multi_reduction <add>, %41, %cst_13 [1, 2] : vector<1x4x1xf32> to vector<1xf32>
    %43 = vector.shape_cast %42 : vector<1xf32> to vector<1x1x1xf32>
    %44 = vector.extract %43[0, 0, 0] : f32 from vector<1x1x1xf32>
    %45 = arith.addf %40, %44 : f32
    %cst_14 = arith.constant 2.000000e+00 : f32
    %46 = arith.mulf %cst_14, %18 : f32
    %47 = arith.subf %45, %46 : f32
    %cst_15 = arith.constant 8.000000e+00 : f32
    %48 = arith.divf %47, %cst_15 : f32
    %cst_16 = arith.constant 1.000000e+00 : f32
    %49 = vector.broadcast %cst_16 : f32 to vector<1x1x128xf32>
    %50 = vector.broadcast %48 : f32 to vector<1x1x128xf32>
    %51 = arith.mulf %50, %49 : vector<1x1x128xf32>
    %c0_17 = arith.constant 0 : index
    %c0_18 = arith.constant 0 : index
    %c0_19 = arith.constant 0 : index
    %52 = vector.load %arg4[%c0_17, %c0_18, %c0_19] : memref<1x1x128xf32, #tpu.memory_space<vmem>>, vector<1x1x128xf32>
    tpu.vector_store %arg4[%c0_17, %c0_18, %c0_19], %51 {strides = array<i32>} : memref<1x1x128xf32, #tpu.memory_space<vmem>>, vector<1x1x128xf32>,
    return
  }
  func.func @transform_0(%arg0: i32) -> i32 {
    %c0_i32 = arith.constant 0 : i32
    %c0_i32_0 = arith.constant 0 : i32
    return %c0_i32 : i32
  }
  func.func @transform_1(%arg0: i32) -> (i32, i32) {
    %c0_i32 = arith.constant 0 : i32
    %c0_i32_0 = arith.constant 0 : i32
    %c0_i32_1 = arith.constant 0 : i32
    return %c0_i32, %c0_i32_0 : i32, i32
  }
  func.func @transform_2(%arg0: i32) -> (i32, i32, i32) {
    %c0_i32 = arith.constant 0 : i32
    %c0_i32_0 = arith.constant 0 : i32
    %c0_i32_1 = arith.constant 0 : i32
    return %arg0, %c0_i32, %c0_i32_0 : i32, i32, i32
  }
  func.func @transform_3(%arg0: i32) -> (i32, i32, i32) {
    %c0_i32 = arith.constant 0 : i32
    %c0_i32_0 = arith.constant 0 : i32
    %c0_i32_1 = arith.constant 0 : i32
    return %arg0, %c0_i32, %c0_i32_0 : i32, i32, i32
  }
}

</mosaic_0001>

<llo_original>
// kernel: tpu_custom_call.1
$region0: #{tpu_custom_call.1}
  #allocation0 [shape = 'u32[]', space=smem, size = 0x4, offset = 0x4, fixed_abs, tag = 'smem constant byte address 0x4 - core index']
  #allocation1 [shape = 'u32[72,128]{1,0:T(1,128)}', space=vmem, size = 0x9000, scoped, tag = 'internal scratch']
  #allocation2 [shape = 'f32[1]{0:T(128)S(6)}', space=smem, size = 0x200, scoped, tag = 'scoped memory for tpu_custom_call.1']
  %s0 = inlined_call_operand.<no memory space> [shape: f32[1], index: 0, kind: input, shape index: {}]
  %s1 = inlined_call_operand.hbm [shape: f32[4,32], index: 1, kind: input, shape index: {}]
  %s2 = inlined_call_operand.hbm [shape: f32[5,4,32], index: 2, kind: input, shape index: {}]
  %s3 = inlined_call_operand.hbm [shape: f32[5,1,128], index: 3, kind: output, shape index: {}]
  %s4 = sld [smem:[#allocation0]]
  $region53: #{tpu_custom_call.1} parent=0
    _
  %s6 = ssub.s32 1, %s4
  %s7 = scalar_select 0, %s6, %s4
  %8 = sst [smem:[#allocation2]] %s0
  $region1: #{tpu_custom_call.1} parent=0
    #allocation3 [shape = 'u8[2048]{0}', space=vmem, size = 0x800, scoped, tag = 'input window, operand 1, single buffered']
    #allocation4 [shape = 's32[2]{0}', space=sflag, size = 0x8, scoped, tag = 'scoped memory for tpu_custom_call.1']
    #allocation5 [shape = 's32[2]{0}', space=sflag, size = 0x8, scoped, tag = 'scoped memory for tpu_custom_call.1']
    #allocation6 [shape = 'u8[4096]{0}', space=vmem, size = 0x1000, scoped, tag = 'input window, operand 2']
    #allocation7 [shape = 's32[2]{0}', space=sflag, size = 0x8, scoped, tag = 'scoped memory for tpu_custom_call.1']
    #allocation8 [shape = 'u8[1024]{0}', space=vmem, size = 0x400, scoped, tag = 'output window, operand 0']
    %9 = vsyncpa [#allocation4], 0
    %10 = vsyncpa [#allocation7], 0
    %s11 = scalar_lea.sflag [#allocation7], 1
    %12 = vsyncpa %s11, 0
    %13 = vsyncpa [#allocation5], 0
    %s14 = scalar_lea.sflag [#allocation5], 1
    %15 = vsyncpa %s14, 0
    loop: start=0, step=1, limit=7
    $region2: #{tpu_custom_call.1} parent=1 // loop_pre_header
      _
    $region3: #{tpu_custom_call.1} parent=1 // loop_header
      %s17 = sphi 0, %s21
      %p18 = scmp.ge.s32.totalorder %s17, 7
      %s25 = sphi 0, %s25
      %s27 = sphi 0, %s25
      %s28 = sphi 0, %s27
      %s42 = sphi 0, %s28
      %s46 = sphi 0, %s46
      %s48 = sphi 0, %s46
      %s49 = sphi 0, %s48
      %s63 = sphi 0, %s49
      %s69 = sphi 0, %s71
      %s72 = sphi 0, %s69
      %s73 = sphi 0, %s72
      %s89 = sphi 0, %s73
      %s95 = sphi 0, %s97
      %s98 = sphi 0, %s95
      %s99 = sphi 0, %s98
      %s115 = sphi 0, %s99
    $region4: #{tpu_custom_call.1} parent=1 // loop_header_branch
      %20 = sbr.rel (%p18) target = $region8
    $region5: #{tpu_custom_call.1} parent=1 // loop_body
      %s22 = ssub.s32 %s17, 1
      %s23 = ssub.s32 %s17, 2
      %s24 = sadd.s32 %s17, 1
      %s26 = sadd.s32 %s25, 1
      %p29 = scmp.eq.s32.totalorder %s17, 4
      %p30 = scmp.ne.s32.totalorder %s25, %s27
      %p31 = scmp.eq.s32.totalorder %s17, 0
      %p32 = por %p30, %p31
      %p33 = scmp.ne.s32.totalorder %s25, %s27
      %p34 = scmp.eq.s32.totalorder %s22, 4
      %p35 = por %p33, %p34
      %p36 = scmp.ne.s32.totalorder %s27, %s28
      %p37 = scmp.eq.s32.totalorder %s22, 0
      %p38 = por %p36, %p37
      %p39 = scmp.ne.s32.totalorder %s27, %s28
      %p40 = scmp.eq.s32.totalorder %s23, 4
      %p41 = por %p39, %p40
      %p43 = scmp.ne.s32.totalorder %s28, %s42
      %p44 = scmp.eq.s32.totalorder %s23, 0
      %p45 = por %p43, %p44
      %s47 = sadd.s32 %s46, 1
      %p50 = scmp.eq.s32.totalorder %s17, 4
      %p51 = scmp.ne.s32.totalorder %s46, %s48
      %p52 = scmp.eq.s32.totalorder %s17, 0
      %p53 = por %p51, %p52
      %p54 = scmp.ne.s32.totalorder %s46, %s48
      %p55 = scmp.eq.s32.totalorder %s22, 4
      %p56 = por %p54, %p55
      %p57 = scmp.ne.s32.totalorder %s48, %s49
      %p58 = scmp.eq.s32.totalorder %s22, 0
      %p59 = por %p57, %p58
      %p60 = scmp.ne.s32.totalorder %s48, %s49
      %p61 = scmp.eq.s32.totalorder %s23, 4
      %p62 = por %p60, %p61
      %p64 = scmp.ne.s32.totalorder %s49, %s63
      %p65 = scmp.eq.s32.totalorder %s23, 0
      %p66 = por %p64, %p65
      %s67 = ssub.s32 %s17, %s24
      %p68 = scmp.eq.s32.totalorder %s67, 0
      %s70 = sadd.s32 %s69, 1
      %s71 = scalar_select %p68, %s69, %s70
      %p74 = pneg %p68
      %p75 = scmp.eq.s32.totalorder %s17, 4
      %p76 = por %p74, %p75
      %p77 = scmp.ne.s32.totalorder %s69, %s72
      %p78 = scmp.eq.s32.totalorder %s17, 0
      %p79 = por %p77, %p78
      %p80 = scmp.ne.s32.totalorder %s69, %s72
      %p81 = scmp.eq.s32.totalorder %s22, 4
      %p82 = por %p80, %p81
      %p83 = scmp.ne.s32.totalorder %s72, %s73
      %p84 = scmp.eq.s32.totalorder %s22, 0
      %p85 = por %p83, %p84
      %p86 = scmp.ne.s32.totalorder %s72, %s73
      %p87 = scmp.eq.s32.totalorder %s23, 4
      %p88 = por %p86, %p87
      %p90 = scmp.ne.s32.totalorder %s73, %s89
      %p91 = scmp.eq.s32.totalorder %s23, 0
      %p92 = por %p90, %p91
      %s93 = ssub.s32 %s17, %s24
      %p94 = scmp.eq.s32.totalorder %s93, 0
      %s96 = sadd.s32 %s95, 1
      %s97 = scalar_select %p94, %s95, %s96
      %p100 = pneg %p94
      %p101 = scmp.eq.s32.totalorder %s17, 4
      %p102 = por %p100, %p101
      %p103 = scmp.ne.s32.totalorder %s95, %s98
      %p104 = scmp.eq.s32.totalorder %s17, 0
      %p105 = por %p103, %p104
      %p106 = scmp.ne.s32.totalorder %s95, %s98
      %p107 = scmp.eq.s32.totalorder %s22, 4
      %p108 = por %p106, %p107
      %p109 = scmp.ne.s32.totalorder %s98, %s99
      %p110 = scmp.eq.s32.totalorder %s22, 0
      %p111 = por %p109, %p110
      %p112 = scmp.ne.s32.totalorder %s98, %s99
      %p113 = scmp.eq.s32.totalorder %s23, 4
      %p114 = por %p112, %p113
      %p116 = scmp.ne.s32.totalorder %s99, %s115
      %p117 = scmp.eq.s32.totalorder %s23, 0
      %p118 = por %p116, %p117
      %p119 = scmp.le.s32.totalorder 1, %s17
      %p120 = scmp.lt.s32.totalorder %s17, 6
      %p121 = pnand %p119, %p120
      %p122 = pneg %p121
      // Predicated region
      $region9: #{tpu_custom_call.1} parent=5 // pred_check
        _
      $region10: #{tpu_custom_call.1} parent=5 // pred_check_branch
        %124 = sbr.rel (%p121) target = $region12
      $region11: #{tpu_custom_call.1} parent=5 // pred_region
        %s125 = ssub.s32 %s17, 1
        // Predicated region
        $region13: #{tpu_custom_call.1} parent=11 // pred_check
          %p126 = pneg %p38
        $region14: #{tpu_custom_call.1} parent=11 // pred_check_branch
          %128 = sbr.rel (%p126) target = $region16
        $region15: #{tpu_custom_call.1} parent=11 // pred_region
          _
        $region16: #{tpu_custom_call.1} parent=11 // pred_fallthru
          _
        // Predicated region
        $region17: #{tpu_custom_call.1} parent=11 // pred_check
          %p129 = pneg %p59
        $region18: #{tpu_custom_call.1} parent=11 // pred_check_branch
          %131 = sbr.rel (%p129) target = $region20
        $region19: #{tpu_custom_call.1} parent=11 // pred_region
          %133 = vsyncadd [#allocation4], 0
          %s135 = sshll.u32 %s1, 4
          %s136 = int_to_ptr.hbm [resolvable:$true] %s135
          %s137 = sshll.u32 [#allocation3], 4
          %s138 = int_to_ptr.vmem [resolvable:$true] %s137
          %140 = dma.hbm_to_vmem [thread:$0]  %s136, 64, %s138, [#allocation4]
        $region20: #{tpu_custom_call.1} parent=11 // pred_fallthru
          _
      $region12: #{tpu_custom_call.1} parent=5 // pred_fallthru
        _
      %p141 = scmp.lt.s32.totalorder %s17, 5
      // Predicated region
      $region21: #{tpu_custom_call.1} parent=5 // pred_check
        %p142 = pneg %p141
      $region22: #{tpu_custom_call.1} parent=5 // pred_check_branch
        %144 = sbr.rel (%p142) target = $region24
      $region23: #{tpu_custom_call.1} parent=5 // pred_region
        // Predicated region
        $region25: #{tpu_custom_call.1} parent=23 // pred_check
          %p145 = pneg %p79
        $region26: #{tpu_custom_call.1} parent=23 // pred_check_branch
          %147 = sbr.rel (%p145) target = $region28
        $region27: #{tpu_custom_call.1} parent=23 // pred_region
          %s148 = sand.u32 %s69, 1
          %s149 = scalar_lea.sflag [#allocation7], %s148
          %s150 = sand.u32 %s69, 1
          %s151 = smul.addr %s150, 4
          %s152 = scalar_lea.vmem [#allocation6], %s151
          %154 = vsyncadd %s149, 0
          %s155 = smul.addr %s17, 4
          %s156 = scalar_lea.hbm %s2, %s155
          %s158 = sshll.u32 %s156, 4
          %s159 = int_to_ptr.hbm [resolvable:$true] %s158
          %s160 = sshll.u32 %s152, 4
          %s161 = int_to_ptr.vmem [resolvable:$true] %s160
          %163 = dma.hbm_to_vmem [thread:$0]  %s159, 64, %s161, %s149
        $region28: #{tpu_custom_call.1} parent=23 // pred_fallthru
          _
      $region24: #{tpu_custom_call.1} parent=5 // pred_fallthru
        _
      %p164 = scmp.le.s32.totalorder 1, %s17
      %p165 = scmp.lt.s32.totalorder %s17, 6
      %p166 = pnand %p164, %p165
      %p167 = pneg %p166
      // Predicated region
      $region29: #{tpu_custom_call.1} parent=5 // pred_check
        _
      $region30: #{tpu_custom_call.1} parent=5 // pred_check_branch
        %169 = sbr.rel (%p166) target = $region32
      $region31: #{tpu_custom_call.1} parent=5 // pred_region
        %s170 = ssub.s32 %s17, 1
        // Predicated region
        $region33: #{tpu_custom_call.1} parent=31 // pred_check
          %p171 = pneg %p59
        $region34: #{tpu_custom_call.1} parent=31 // pred_check_branch
          %173 = sbr.rel (%p171) target = $region36
        $region35: #{tpu_custom_call.1} parent=31 // pred_region
          %175 = dma.done [#allocation4], 64
        $region36: #{tpu_custom_call.1} parent=31 // pred_fallthru
          _
        %s176 = sand.u32 %s72, 1
        %s177 = scalar_lea.sflag [#allocation7], %s176
        %s178 = sand.u32 %s72, 1
        %s179 = smul.addr %s178, 4
        %s180 = scalar_lea.vmem [#allocation6], %s179
        // Predicated region
        $region37: #{tpu_custom_call.1} parent=31 // pred_check
          %p181 = pneg %p85
        $region38: #{tpu_custom_call.1} parent=31 // pred_check_branch
          %183 = sbr.rel (%p181) target = $region40
        $region39: #{tpu_custom_call.1} parent=31 // pred_region
          %185 = dma.done %s177, 64
        $region40: #{tpu_custom_call.1} parent=31 // pred_fallthru
          _
        %p186 = pneg %p38
        %p187 = pneg %p35
        %p188 = pneg %p59
        %p189 = pneg %p56
        %s190 = sand.u32 %s72, 1
        %s191 = scalar_lea.sflag [#allocation7], %s190
        %s192 = sand.u32 %s72, 1
        %s193 = smul.addr %s192, 4
        %s194 = scalar_lea.vmem [#allocation6], %s193
        %p195 = pneg %p85
        %p196 = pneg %p82
        %p197 = pneg %p111
        %p198 = pneg %p108
        %s199 = sand.u32 %s98, 1
        %s200 = scalar_lea.sflag [#allocation5], %s199
        %s201 = sand.u32 %s98, 1
        %s202 = scalar_lea.vmem [#allocation8], %s201
        %s203 = sld [smem:[#allocation2]]
        %v204 = vld [vmem:[#allocation3] sm:$0xf]
        %v205 = vld [vmem:[%s180] sm:$0xf]
        %vm206 = vcmask 261120
        %v208 = vsel %vm206, %v204, 0
        %v211 = vsel %vm206, %v205, 0
        %213 = vmatpush.xpose.msra.mxu0 0.0
        %214 = vmatpush.xpose.msra.mxu0 0.0
        %215 = vmatpush.xpose.msra.mxu0 0.0
        %216 = vmatpush.xpose.msra.mxu0 0.0
        %217 = vmatpush.xpose.msra.mxu0 0.0
        %218 = vmatpush.xpose.msra.mxu0 0.0
        %219 = vmatpush.xpose.msra.mxu0 0.0
        %220 = vmatpush.xpose.msra.mxu0 0.0
        %221 = vmatpush.xpose.msra.mxu0 0.0
        %222 = vmatpush.xpose.msra.mxu0 0.0
        %223 = vmatpush.xpose.msra.mxu0 0.0
        %224 = vmatpush.xpose.msra.mxu0 0.0
        %225 = vmatpush.xpose.msra.mxu0 0.0
        %226 = vmatpush.xpose.msra.mxu0 0.0
        %227 = vmatpush.xpose.msra.mxu0 0.0
        %228 = vmatpush.xpose.msra.mxu0 %v211
        %229 = vmatmul.f32.gmra.mxu0 %v208
        %v230 = vpop.f32.mrf.mxu0
        %v231 = vadd.f32 0.0, %v230
        %232 = vdwg.mxu0
        %v233 = vstv %s203
        %v234 = vmul.f32 %v233, %v231
        %235 = vmatpush.xpose.msra.mxu0 0.0
        %236 = vmatpush.xpose.msra.mxu0 0.0
        %237 = vmatpush.xpose.msra.mxu0 0.0
        %238 = vmatpush.xpose.msra.mxu0 0.0
        %239 = vmatpush.xpose.msra.mxu0 0.0
        %240 = vmatpush.xpose.msra.mxu0 0.0
        %241 = vmatpush.xpose.msra.mxu0 0.0
        %242 = vmatpush.xpose.msra.mxu0 0.0
        %243 = vmatpush.xpose.msra.mxu0 0.0
        %244 = vmatpush.xpose.msra.mxu0 0.0
        %245 = vmatpush.xpose.msra.mxu0 0.0
        %246 = vmatpush.xpose.msra.mxu0 0.0
        %247 = vmatpush.xpose.msra.mxu0 0.0
        %248 = vmatpush.xpose.msra.mxu0 0.0
        %249 = vmatpush.xpose.msra.mxu0 0.0
        %250 = vmatpush.xpose.msra.mxu0 %v208
        %251 = vmatmul.f32.gmra.mxu0 %v211
        %v252 = vpop.f32.mrf.mxu0
        %v253 = vadd.f32 0.0, %v252
        %254 = vdwg.mxu0
        %v255 = vmul.f32 %v233, %v253
        %v256 = vlaneseq
        %v257 = vshrl.u32 %v256, 7
        %v258 = vlaneseq
        %v259 = vand.u32 %v258, 127
        %vm260 = vcmp.eq.s32.totalorder %v257, %v259
        %v261 = vsel %vm260, %v234, 0.0
        %vm262 = vcmask 27648
        %v263 = vsel %vm262, %v261, 0.0
        %264 = vadd.xlane.f32.xlu0 %v263
        %v265 = vpop.xlane.xlu0 %264
        %v266 = vrot.slane %v265, 4
        %v267 = vadd.f32 %v265, %v266
        %v268 = vrot.slane %v267, 2
        %v269 = vadd.f32 %v267, %v268
        %v270 = vrot.slane %v269, 1
        %v271 = vadd.f32 %v269, %v270
        %s272 = vtos %v271
        %v273 = vsel %vm262, %v234, -inf
        %274 = vmax.xlane.f32.xlu0 %v273
        %v275 = vpop.xlane.xlu0 %274
        %v276 = vsub.f32 %v234, %v275
        %v277 = vmul.f32 %v276, 1.442695
        %v278 = vpow.pop %v277
        %v279 = vsel %vm262, %v278, 0.0
        %280 = vadd.xlane.f32.xlu0 %v279
        %v281 = vpop.xlane.xlu0 %280
        %v282 = vlog2.pop %v281
        %v283 = vmul.f32 %v282, 0.6931472
        %v284 = vadd.f32 %v275, %v283
        %v285 = vsel %vm262, %v255, -inf
        %286 = vmax.xlane.f32.xlu0 %v285
        %v287 = vpop.xlane.xlu0 %286
        %v288 = vsub.f32 %v255, %v287
        %v289 = vmul.f32 %v288, 1.442695
        %v290 = vpow.pop %v289
        %v291 = vsel %vm262, %v290, 0.0
        %292 = vadd.xlane.f32.xlu0 %v291
        %v293 = vpop.xlane.xlu0 %292
        %v294 = vlog2.pop %v293
        %v295 = vmul.f32 %v294, 0.6931472
        %v296 = vadd.f32 %v287, %v295
        %vm297 = vcmask 3072
        %v298 = vsel %vm297, %v284, 0.0
        %299 = vadd.xlane.f32.xlu0 %v298
        %v300 = vpop.xlane.xlu0 %299
        %v301 = vrot.slane %v300, 4
        %v302 = vadd.f32 %v300, %v301
        %v303 = vrot.slane %v302, 2
        %v304 = vadd.f32 %v302, %v303
        %v305 = vrot.slane %v304, 1
        %v306 = vadd.f32 %v304, %v305
        %s307 = vtos %v306
        %v308 = vsel %vm297, %v296, 0.0
        %309 = vadd.xlane.f32.xlu0 %v308
        %v310 = vpop.xlane.xlu0 %309
        %v311 = vrot.slane %v310, 4
        %v312 = vadd.f32 %v310, %v311
        %v313 = vrot.slane %v312, 2
        %v314 = vadd.f32 %v312, %v313
        %v315 = vrot.slane %v314, 1
        %v316 = vadd.f32 %v314, %v315
        %s317 = vtos %v316
        %s318 = sadd.f32 %s307, %s317
        %s319 = smul.f32 %s272, 2.0
        %s320 = ssub.f32 %s318, %s319
        %v321 = vrcp.pop 8.0
        %v322 = vmul.f32 8.0, %v321
        %v323 = vsub.f32 1.0, %v322
        %v324 = vmul.f32 %v321, %v323
        %v325 = vadd.f32 %v321, %v324
        %vm326 = vweird.f32 %v321
        %v327 = vsel %vm326, %v321, %v325
        %s328 = vtos %v327
        %s329 = smul.f32 %s320, %s328
        %v330 = vstv %s329
        %331 = vst [vmem:[%s202] sm:$0x1] %v330
        %s332 = sand.u32 %s98, 1
        %s333 = scalar_lea.sflag [#allocation5], %s332
        %s334 = sand.u32 %s98, 1
        %s335 = scalar_lea.vmem [#allocation8], %s334
        // Predicated region
        $region41: #{tpu_custom_call.1} parent=31 // pred_check
          %p336 = pneg %p108
        $region42: #{tpu_custom_call.1} parent=31 // pred_check_branch
          %338 = sbr.rel (%p336) target = $region44
        $region43: #{tpu_custom_call.1} parent=31 // pred_region
          %340 = vsyncadd %s333, 0
          %s341 = scalar_lea.hbm %s3, %s22
          %s343 = sshll.u32 %s335, 4
          %s344 = int_to_ptr.vmem [resolvable:$true] %s343
          %s345 = sshll.u32 %s341, 4
          %s346 = int_to_ptr.hbm [resolvable:$true] %s345
          %348 = dma.vmem_to_hbm [thread:$0]  %s344, 16, %s346, %s333
        $region44: #{tpu_custom_call.1} parent=31 // pred_fallthru
          _
      $region32: #{tpu_custom_call.1} parent=5 // pred_fallthru
        _
      %p349 = scmp.le.s32.totalorder 2, %s17
      // Predicated region
      $region45: #{tpu_custom_call.1} parent=5 // pred_check
        %p350 = pneg %p349
      $region46: #{tpu_custom_call.1} parent=5 // pred_check_branch
        %352 = sbr.rel (%p350) target = $region48
      $region47: #{tpu_custom_call.1} parent=5 // pred_region
        %s353 = ssub.s32 %s17, 2
        // Predicated region
        $region49: #{tpu_custom_call.1} parent=47 // pred_check
          %p354 = pneg %p114
        $region50: #{tpu_custom_call.1} parent=47 // pred_check_branch
          %356 = sbr.rel (%p354) target = $region52
        $region51: #{tpu_custom_call.1} parent=47 // pred_region
          %s357 = sand.u32 %s99, 1
          %s358 = scalar_lea.sflag [#allocation5], %s357
          %s359 = sand.u32 %s99, 1
          %s360 = scalar_lea.vmem [#allocation8], %s359
          %362 = dma.done %s358, 16
        $region52: #{tpu_custom_call.1} parent=47 // pred_fallthru
          _
      $region48: #{tpu_custom_call.1} parent=5 // pred_fallthru
        _
    $region6: #{tpu_custom_call.1} parent=1 // loop_footer
      %s21 = sadd.s32 1, %s17
    $region7: #{tpu_custom_call.1} parent=1 // loop_footer_branch
      %16 = sbr.rel target = $region3
    $region8: #{tpu_custom_call.1} parent=1 // loop_exit
      _
    %363 = vsyncpa [#allocation4], 1
    %s364 = scalar_lea.sflag [#allocation4], 1
    %365 = vsyncpa %s364, 1
    %366 = vsyncpa [#allocation7], 1
    %s367 = scalar_lea.sflag [#allocation7], 1
    %368 = vsyncpa %s367, 1
    %369 = vsyncpa [#allocation5], 1
    %s370 = scalar_lea.sflag [#allocation5], 1
    %371 = vsyncpa %s370, 1

</llo_original>
